<compile_context>
chip_gen: v7x
topology: tpu7x:2x2x1
jax: 0.10.0
libtpu: 0.0.40
codegen_flags: <defaults>
</compile_context>

<pallas_src>
import math

import numpy as np

import jax
import jax.numpy as jnp
from jax import lax
from jax.experimental import pallas as pl
from jax.experimental.pallas import tpu as pltpu


# Odd <2^31 constants (lowbias32-style avalanche).  int32 arithmetic wraps in
# XLA exactly like uint32, and lax.shift_right_logical gives the unsigned shift.
_C_SEED = 0x61C88647   # golden-ratio style mixer for the seed
_C_M1 = 0x21F0AAAD
_C_M2 = 0x735A2D97


def _hash_fill_kernel(seed_ref, scale_ref, out_ref):
    """Fill one (rows, lanes) tile with Uniform(-bound, +bound) samples.

    seed_ref : SMEM int32[1]         -- base seed for the whole slab
    scale_ref: SMEM float32[n_tiles] -- per-tile bound (1/sqrt(fan_in))
    out_ref  : VMEM float32[rows, lanes] tile of the fused output slab
    """
    i = pl.program_id(0)
    rows, lanes = out_ref.shape

    # Global linear element index of every element of this tile (int32 wraps;
    # uniqueness of streams is preserved mod 2^32).
    base = i * (rows * lanes)
    row = lax.broadcasted_iota(jnp.int32, (rows, lanes), 0)
    col = lax.broadcasted_iota(jnp.int32, (rows, lanes), 1)
    idx = base + row * lanes + col          # lanes is a power of 2 -> shift

    # Counter-based hash of (seed, index): unique stream per element, so tiles
    # never repeat each other (no stateful reseeding needed).
    seed_mixed = seed_ref[0] * _C_SEED      # scalar, on the scalar unit
    x = idx ^ seed_mixed
    x = x ^ lax.shift_right_logical(x, 16)
    x = x * _C_M1
    x = x ^ lax.shift_right_logical(x, 15)
    x = x * _C_M2
    x = x ^ lax.shift_right_logical(x, 15)

    # Top 24 bits -> exact float32 in [0, 2^24); fold the uniform mapping into
    # a single multiply-add:  out = u24 * (2*bound / 2^24) - bound
    u24 = lax.shift_right_logical(x, 8).astype(jnp.float32)
    bound = scale_ref[i]
    out_ref[...] = u24 * (bound * jnp.float32(2.0 / (1 << 24))) - bound


def _round_up(x, m):
    return (x + m - 1) // m * m


def gen_basis_forward(basis_num, hidden, seed, state="train",
                      *, lanes=1024, max_tile_rows=512):
    """Pallas equivalent of gen_basis.forward() in 'train' state.

    Returns (basis, bias):
      basis[0]: (B, hidden*580)    bias[0]: (B, hidden)
      basis[1]: (B, hidden*hidden) bias[1]: (B, hidden)
      basis[2]: (B, hidden*hidden) bias[2]: (B, hidden)
      basis[3]: (B, hidden*hidden) bias[3]: (B, hidden)
      basis[4]: (B, 3*hidden)      bias[4]: (B, 3)
    """
    if state != "train":
        # TODO(synk): 'test' path loads weights via torch.load(path) — no Pallas equivalent.
        raise NotImplementedError("only the 'train' (init) path is implemented")

    B, H = int(basis_num), int(hidden)
    weight_shapes = [(B, H * 580), (B, H * H), (B, H * H), (B, H * H), (B, 3 * H)]
    bias_shapes = [(B, H), (B, H), (B, H), (B, H), (B, 3)]
    shapes = weight_shapes + bias_shapes

    # kaiming_uniform_(a=sqrt(5)) on 2-D: bound = 1/sqrt(fan_in) = 1/sqrt(dim 1).
    # Biases reuse the matching weight's fan_in (same bound).
    fan_ins = [s[1] for s in weight_shapes]
    w_bounds = [1.0 / math.sqrt(f) if f > 0 else 0.0 for f in fan_ins]
    bounds = w_bounds + w_bounds

    # --- fused slab layout -------------------------------------------------
    sizes = [s[0] * s[1] for s in shapes]
    max_size = max(sizes)
    # Tile: (rows_per_tile, lanes).  rows multiple of 8, lanes multiple of 128,
    # tile capped at 2 MiB so the double buffer (4 MiB) fits every chip's
    # scoped-VMEM default while giving near-roofline store bandwidth.
    rows_per_tile = max(8, min(max_tile_rows, _round_up(pl.cdiv(max_size, lanes), 8)))
    tile_elems = rows_per_tile * lanes

    tiles_per_tensor = [pl.cdiv(n, tile_elems) for n in sizes]
    tile_offsets = np.concatenate([[0], np.cumsum(tiles_per_tensor)]).astype(np.int64)
    num_tiles = int(tile_offsets[-1])
    total_rows = num_tiles * rows_per_tile

    scale_per_tile = np.repeat(np.asarray(bounds, dtype=np.float32),
                               np.asarray(tiles_per_tensor))

    slab = pl.pallas_call(
        _hash_fill_kernel,
        out_shape=jax.ShapeDtypeStruct((total_rows, lanes), jnp.float32),
        grid=(num_tiles,),
        in_specs=[
            pl.BlockSpec(memory_space=pltpu.MemorySpace.SMEM),  # seed
            pl.BlockSpec(memory_space=pltpu.MemorySpace.SMEM),  # per-tile bound
        ],
        out_specs=pl.BlockSpec((rows_per_tile, lanes), lambda i: (i, 0)),
        compiler_params=pltpu.CompilerParams(
            dimension_semantics=("parallel",),      # shards tiles across v7x's 2 TCs
            vmem_limit_bytes=32 * 1024 * 1024,
        ),
    )(jnp.asarray([int(seed)], dtype=jnp.int32), jnp.asarray(scale_per_tile))

    # --- slice each tensor back out of the slab ----------------------------
    flat = slab.reshape(-1)   # row-major view; slices below are one-time copies
    outs = []
    for t, shp in enumerate(shapes):
        start = int(tile_offsets[t]) * tile_elems
        n = shp[0] * shp[1]
        outs.append(flat[start:start + n].reshape(shp))
    return outs[:5], outs[5:]


if __name__ == "__main__":
    # Small synthetic config (args.basis_num, args.hidden)
    basis_num = 4
    hidden = 8

    # Deterministic base seed derived from PRNGKey(0)
    key = jax.random.PRNGKey(0)
    seed = int(jax.device_get(
        jax.random.randint(key, (), 0, 2**31 - 1, dtype=jnp.int32)))

    basis, bias = gen_basis_forward(basis_num, hidden, seed, state="train")

    for t in basis + bias:
        jax.block_until_ready(t)

    # Shape checks (match the nn.Parameter shapes of the module)
    assert basis[0].shape == (basis_num, hidden * 580)
    assert basis[1].shape == (basis_num, hidden * hidden)
    assert basis[2].shape == (basis_num, hidden * hidden)
    assert basis[3].shape == (basis_num, hidden * hidden)
    assert basis[4].shape == (basis_num, 3 * hidden)
    assert bias[0].shape == (basis_num, hidden)
    assert bias[3].shape == (basis_num, hidden)
    assert bias[4].shape == (basis_num, 3)

    # Range checks: every value in [-bound, bound) with bound = 1/sqrt(fan_in)
    b0 = 1.0 / math.sqrt(hidden * 580)
    b1 = 1.0 / math.sqrt(hidden * hidden)
    b4 = 1.0 / math.sqrt(3 * hidden)
    assert float(jnp.max(jnp.abs(basis[0]))) <= b0 + 1e-7
    assert float(jnp.max(jnp.abs(bias[0]))) <= b0 + 1e-7
    assert float(jnp.max(jnp.abs(basis[1]))) <= b1 + 1e-7
    assert float(jnp.max(jnp.abs(basis[4]))) <= b4 + 1e-7
    assert float(jnp.max(jnp.abs(bias[4]))) <= b4 + 1e-7

    # Distribution sanity: values span the range and tensors are distinct
    assert float(jnp.max(basis[1])) > 0.3 * b1
    assert float(jnp.min(basis[1])) < -0.3 * b1
    assert not bool(jnp.all(bias[1] == bias[2]))
    assert not bool(jnp.all(basis[1] == basis[2]))

    print("KERNEL_OK")
</pallas_src>

<mosaic_0001>
module attributes {stable_mosaic.version = 11 : i64} {
  func.func @_hash_fill_kernel(%arg0: i32, %arg1: memref<1xi32, #tpu.memory_space<smem>>, %arg2: memref<10xf32, #tpu.memory_space<smem>>, %arg3: memref<24x1024xf32, #tpu.memory_space<vmem>>) attributes {dimension_semantics = [#tpu.dimension_semantics<parallel>], iteration_bounds = array<i64: 10>, scalar_prefetch = 0 : i64, scratch_operands = 0 : i64, tpu.core_type = #tpu.core_type<tc>, window_params = [{transform_indices = @transform_0, window_bounds = array<i64: 1>}, {transform_indices = @transform_1, window_bounds = array<i64: 10>}, {transform_indices = @transform_2, window_bounds = array<i64: 24, 1024>}]} {
    %c24576_i32 = arith.constant 24576 : i32
    %0 = arith.muli %arg0, %c24576_i32 : i32
    %1 = tpu.iota {dimensions = array<i32: 0>} : vector<24x1024xi32>
    %2 = tpu.iota {dimensions = array<i32: 1>} : vector<24x1024xi32>
    %c1024_i32 = arith.constant 1024 : i32
    %3 = vector.broadcast %c1024_i32 : i32 to vector<24x1024xi32>
    %4 = arith.muli %1, %3 : vector<24x1024xi32>
    %5 = vector.broadcast %0 : i32 to vector<24x1024xi32>
    %6 = arith.addi %5, %4 : vector<24x1024xi32>
    %7 = arith.addi %6, %2 : vector<24x1024xi32>
    %c0 = arith.constant 0 : index
    %8 = memref.load %arg1[%c0] : memref<1xi32, #tpu.memory_space<smem>>
    %c1640531527_i32 = arith.constant 1640531527 : i32
    %9 = arith.muli %8, %c1640531527_i32 : i32
    %10 = vector.broadcast %9 : i32 to vector<24x1024xi32>
    %11 = arith.xori %7, %10 : vector<24x1024xi32>
    %c16_i32 = arith.constant 16 : i32
    %12 = vector.broadcast %c16_i32 : i32 to vector<24x1024xi32>
    %13 = arith.shrui %11, %12 : vector<24x1024xi32>
    %14 = arith.xori %11, %13 : vector<24x1024xi32>
    %c569420461_i32 = arith.constant 569420461 : i32
    %15 = vector.broadcast %c569420461_i32 : i32 to vector<24x1024xi32>
    %16 = arith.muli %14, %15 : vector<24x1024xi32>
    %c15_i32 = arith.constant 15 : i32
    %17 = vector.broadcast %c15_i32 : i32 to vector<24x1024xi32>
    %18 = arith.shrui %16, %17 : vector<24x1024xi32>
    %19 = arith.xori %16, %18 : vector<24x1024xi32>
    %c1935289751_i32 = arith.constant 1935289751 : i32
    %20 = vector.broadcast %c1935289751_i32 : i32 to vector<24x1024xi32>
    %21 = arith.muli %19, %20 : vector<24x1024xi32>
    %c15_i32_0 = arith.constant 15 : i32
    %22 = vector.broadcast %c15_i32_0 : i32 to vector<24x1024xi32>
    %23 = arith.shrui %21, %22 : vector<24x1024xi32>
    %24 = arith.xori %21, %23 : vector<24x1024xi32>
    %c8_i32 = arith.constant 8 : i32
    %25 = vector.broadcast %c8_i32 : i32 to vector<24x1024xi32>
    %26 = arith.shrui %24, %25 : vector<24x1024xi32>
    %27 = arith.sitofp %26 : vector<24x1024xi32> to vector<24x1024xf32>
    %28 = arith.index_cast %arg0 : i32 to index
    %29 = memref.load %arg2[%28] : memref<10xf32, #tpu.memory_space<smem>>
    %cst = arith.constant 1.1920929E-7 : f32
    %30 = arith.mulf %29, %cst : f32
    %31 = vector.broadcast %30 : f32 to vector<24x1024xf32>
    %32 = arith.mulf %27, %31 : vector<24x1024xf32>
    %33 = vector.broadcast %29 : f32 to vector<24x1024xf32>
    %34 = arith.subf %32, %33 : vector<24x1024xf32>
    %c0_1 = arith.constant 0 : index
    %c0_2 = arith.constant 0 : index
    %35 = vector.load %arg3[%c0_1, %c0_2] : memref<24x1024xf32, #tpu.memory_space<vmem>>, vector<24x1024xf32>
    tpu.vector_store %arg3[%c0_1, %c0_2], %34 {strides = array<i32>} : memref<24x1024xf32, #tpu.memory_space<vmem>>, vector<24x1024xf32>,
    return
  }
  func.func @transform_0(%arg0: i32) -> i32 {
    %c0_i32 = arith.constant 0 : i32
    %c0_i32_0 = arith.constant 0 : i32
    return %c0_i32 : i32
  }
  func.func @transform_1(%arg0: i32) -> i32 {
    %c0_i32 = arith.constant 0 : i32
    %c0_i32_0 = arith.constant 0 : i32
    return %c0_i32 : i32
  }
  func.func @transform_2(%arg0: i32) -> (i32, i32) {
    %c0_i32 = arith.constant 0 : i32
    %c0_i32_0 = arith.constant 0 : i32
    return %arg0, %c0_i32 : i32, i32
  }
}

</mosaic_0001>

<llo_original>
// kernel: tpu_custom_call.1
$region0: #{tpu_custom_call.1}
  #allocation0 [shape = 'u32[]', space=smem, size = 0x4, offset = 0x4, fixed_abs, tag = 'smem constant byte address 0x4 - core index']
  #allocation1 [shape = 'u32[144,128]{1,0:T(1,128)}', space=vmem, size = 0x12000, scoped, tag = 'internal scratch']
  #allocation2 [shape = 's32[1]{0:T(128)S(6)}', space=smem, size = 0x200, scoped, tag = 'scoped memory for tpu_custom_call.1']
  %s0 = inlined_call_operand.<no memory space> [shape: s32[1], index: 0, kind: input, shape index: {}]
  %s1 = inlined_call_operand.vmem [shape: f32[10], index: 1, kind: input, shape index: {}]
  %s2 = inlined_call_operand.hbm [shape: f32[240,1024], index: 2, kind: output, shape index: {}]
  %s3 = sld [smem:[#allocation0]]
  $region45: #{tpu_custom_call.1} parent=0
    _
  %s5 = ssub.s32 1, %s3
  %s6 = scalar_select 0, %s5, %s3
  %7 = sst [smem:[#allocation2]] %s0
  $region1: #{tpu_custom_call.1} parent=0
    #allocation3 [shape = 'u8[512]{0}', space=smem, size = 0x200, scoped, tag = 'input window, operand 1, single buffered']
    #allocation4 [shape = 's32[2]{0}', space=sflag, size = 0x8, scoped, tag = 'scoped memory for tpu_custom_call.1']
    #allocation5 [shape = 's32[2]{0}', space=sflag, size = 0x8, scoped, tag = 'scoped memory for tpu_custom_call.1']
    #allocation6 [shape = 'u8[196608]{0}', space=vmem, size = 0x30000, scoped, tag = 'output window, operand 0']
    %8 = vsyncpa [#allocation5], 0
    %9 = vsyncpa [#allocation4], 0
    %s10 = scalar_lea.sflag [#allocation4], 1
    %11 = vsyncpa %s10, 0
    loop: start=0, step=1, limit=12
    $region2: #{tpu_custom_call.1} parent=1 // loop_pre_header
      _
    $region3: #{tpu_custom_call.1} parent=1 // loop_header
      %s13 = sphi 0, %s17
      %p14 = scmp.ge.s32.totalorder %s13, 12
      %s21 = sphi 0, %s21
      %s23 = sphi 0, %s21
      %s24 = sphi 0, %s23
      %s38 = sphi 0, %s24
      %s42 = sphi 0, %s42
      %s44 = sphi 0, %s42
      %s45 = sphi 0, %s44
      %s59 = sphi 0, %s45
      %s65 = sphi 0, %s67
      %s68 = sphi 0, %s65
      %s69 = sphi 0, %s68
      %s85 = sphi 0, %s69
    $region4: #{tpu_custom_call.1} parent=1 // loop_header_branch
      %16 = sbr.rel (%p14) target = $region8
    $region5: #{tpu_custom_call.1} parent=1 // loop_body
      %s18 = ssub.s32 %s13, 1
      %s19 = ssub.s32 %s13, 2
      %s20 = sadd.s32 %s13, 1
      %s22 = sadd.s32 %s21, 1
      %p25 = scmp.eq.s32.totalorder %s13, 9
      %p26 = scmp.ne.s32.totalorder %s21, %s23
      %p27 = scmp.eq.s32.totalorder %s13, 0
      %p28 = por %p26, %p27
      %p29 = scmp.ne.s32.totalorder %s21, %s23
      %p30 = scmp.eq.s32.totalorder %s18, 9
      %p31 = por %p29, %p30
      %p32 = scmp.ne.s32.totalorder %s23, %s24
      %p33 = scmp.eq.s32.totalorder %s18, 0
      %p34 = por %p32, %p33
      %p35 = scmp.ne.s32.totalorder %s23, %s24
      %p36 = scmp.eq.s32.totalorder %s19, 9
      %p37 = por %p35, %p36
      %p39 = scmp.ne.s32.totalorder %s24, %s38
      %p40 = scmp.eq.s32.totalorder %s19, 0
      %p41 = por %p39, %p40
      %s43 = sadd.s32 %s42, 1
      %p46 = scmp.eq.s32.totalorder %s13, 9
      %p47 = scmp.ne.s32.totalorder %s42, %s44
      %p48 = scmp.eq.s32.totalorder %s13, 0
      %p49 = por %p47, %p48
      %p50 = scmp.ne.s32.totalorder %s42, %s44
      %p51 = scmp.eq.s32.totalorder %s18, 9
      %p52 = por %p50, %p51
      %p53 = scmp.ne.s32.totalorder %s44, %s45
      %p54 = scmp.eq.s32.totalorder %s18, 0
      %p55 = por %p53, %p54
      %p56 = scmp.ne.s32.totalorder %s44, %s45
      %p57 = scmp.eq.s32.totalorder %s19, 9
      %p58 = por %p56, %p57
      %p60 = scmp.ne.s32.totalorder %s45, %s59
      %p61 = scmp.eq.s32.totalorder %s19, 0
      %p62 = por %p60, %p61
      %s63 = ssub.s32 %s13, %s20
      %p64 = scmp.eq.s32.totalorder %s63, 0
      %s66 = sadd.s32 %s65, 1
      %s67 = scalar_select %p64, %s65, %s66
      %p70 = pneg %p64
      %p71 = scmp.eq.s32.totalorder %s13, 9
      %p72 = por %p70, %p71
      %p73 = scmp.ne.s32.totalorder %s65, %s68
      %p74 = scmp.eq.s32.totalorder %s13, 0
      %p75 = por %p73, %p74
      %p76 = scmp.ne.s32.totalorder %s65, %s68
      %p77 = scmp.eq.s32.totalorder %s18, 9
      %p78 = por %p76, %p77
      %p79 = scmp.ne.s32.totalorder %s68, %s69
      %p80 = scmp.eq.s32.totalorder %s18, 0
      %p81 = por %p79, %p80
      %p82 = scmp.ne.s32.totalorder %s68, %s69
      %p83 = scmp.eq.s32.totalorder %s19, 9
      %p84 = por %p82, %p83
      %p86 = scmp.ne.s32.totalorder %s69, %s85
      %p87 = scmp.eq.s32.totalorder %s19, 0
      %p88 = por %p86, %p87
      %p89 = scmp.le.s32.totalorder 1, %s13
      %p90 = scmp.lt.s32.totalorder %s13, 11
      %p91 = pnand %p89, %p90
      %p92 = pneg %p91
      // Predicated region
      $region9: #{tpu_custom_call.1} parent=5 // pred_check
        _
      $region10: #{tpu_custom_call.1} parent=5 // pred_check_branch
        %94 = sbr.rel (%p91) target = $region12
      $region11: #{tpu_custom_call.1} parent=5 // pred_region
        %s95 = ssub.s32 %s13, 1
        // Predicated region
        $region13: #{tpu_custom_call.1} parent=11 // pred_check
          %p96 = pneg %p34
        $region14: #{tpu_custom_call.1} parent=11 // pred_check_branch
          %98 = sbr.rel (%p96) target = $region16
        $region15: #{tpu_custom_call.1} parent=11 // pred_region
          _
        $region16: #{tpu_custom_call.1} parent=11 // pred_fallthru
          _
        // Predicated region
        $region17: #{tpu_custom_call.1} parent=11 // pred_check
          %p99 = pneg %p55
        $region18: #{tpu_custom_call.1} parent=11 // pred_check_branch
          %101 = sbr.rel (%p99) target = $region20
        $region19: #{tpu_custom_call.1} parent=11 // pred_region
          %s103 = ssub.s32 16, 16
          %104 = vsyncadd [#allocation5], %s103
          %s106 = sshll.u32 %s1, 4
          %s107 = int_to_ptr.vmem [resolvable:$true] %s106
          %109 = dma.vmem_to_smem %s107, 16, [#allocation3], [#allocation5]
        $region20: #{tpu_custom_call.1} parent=11 // pred_fallthru
          _
      $region12: #{tpu_custom_call.1} parent=5 // pred_fallthru
        _
      %p110 = scmp.lt.s32.totalorder %s13, 10
      // Predicated region
      $region21: #{tpu_custom_call.1} parent=5 // pred_check
        %p111 = pneg %p110
      $region22: #{tpu_custom_call.1} parent=5 // pred_check_branch
        %113 = sbr.rel (%p111) target = $region24
      $region23: #{tpu_custom_call.1} parent=5 // pred_region
        _
      $region24: #{tpu_custom_call.1} parent=5 // pred_fallthru
        _
      %p114 = scmp.le.s32.totalorder 1, %s13
      %p115 = scmp.lt.s32.totalorder %s13, 11
      %p116 = pnand %p114, %p115
      %p117 = pneg %p116
      // Predicated region
      $region25: #{tpu_custom_call.1} parent=5 // pred_check
        _
      $region26: #{tpu_custom_call.1} parent=5 // pred_check_branch
        %119 = sbr.rel (%p116) target = $region28
      $region27: #{tpu_custom_call.1} parent=5 // pred_region
        %s120 = ssub.s32 %s13, 1
        // Predicated region
        $region29: #{tpu_custom_call.1} parent=27 // pred_check
          %p121 = pneg %p55
        $region30: #{tpu_custom_call.1} parent=27 // pred_check_branch
          %123 = sbr.rel (%p121) target = $region32
        $region31: #{tpu_custom_call.1} parent=27 // pred_region
          %124 = dma.done [#allocation5], 16
        $region32: #{tpu_custom_call.1} parent=27 // pred_fallthru
          _
        %125 = sfence
        %p126 = pneg %p34
        %p127 = pneg %p31
        %p128 = pneg %p55
        %p129 = pneg %p52
        %p130 = pneg %p81
        %p131 = pneg %p78
        %s132 = sand.u32 %s68, 1
        %s133 = scalar_lea.sflag [#allocation4], %s132
        %s134 = sand.u32 %s68, 1
        %s135 = smul.addr %s134, 192
        %s136 = scalar_lea.vmem [#allocation6], %s135
        %s137 = smul.u32 3, %s18
        %s138 = smul.u32 %s18, 24576
        %v139 = vlaneseq
        %v140 = vshrl.u32 %v139, 7
        %v141 = vadd.s32 %v140, 8
        %v142 = vadd.s32 %v140, 16
        %v143 = vlaneseq
        %v144 = vand.u32 %v143, 127
        %v145 = vadd.s32 %v144, 128
        %v146 = vadd.s32 %v144, 256
        %v147 = vadd.s32 %v144, 384
        %v148 = vadd.s32 %v144, 512
        %v149 = vadd.s32 %v144, 640
        %v150 = vadd.s32 %v144, 768
        %v151 = vadd.s32 %v144, 896
        %v152 = vmul.u32 %v140, 1024
        %v153 = vmul.u32 %v141, 1024
        %v154 = vmul.u32 %v142, 1024
        %v155 = vstv %s138
        %v156 = vadd.s32 %v155, %v152
        %v157 = vadd.s32 %v155, %v153
        %v158 = vadd.s32 %v155, %v154
        %v159 = vadd.s32 %v156, %v144
        %v160 = vadd.s32 %v156, %v145
        %v161 = vadd.s32 %v156, %v146
        %v162 = vadd.s32 %v156, %v147
        %v163 = vadd.s32 %v156, %v148
        %v164 = vadd.s32 %v156, %v149
        %v165 = vadd.s32 %v156, %v150
        %v166 = vadd.s32 %v156, %v151
        %v167 = vadd.s32 %v157, %v144
        %v168 = vadd.s32 %v157, %v145
        %v169 = vadd.s32 %v157, %v146
        %v170 = vadd.s32 %v157, %v147
        %v171 = vadd.s32 %v157, %v148
        %v172 = vadd.s32 %v157, %v149
        %v173 = vadd.s32 %v157, %v150
        %v174 = vadd.s32 %v157, %v151
        %v175 = vadd.s32 %v158, %v144
        %v176 = vadd.s32 %v158, %v145
        %v177 = vadd.s32 %v158, %v146
        %v178 = vadd.s32 %v158, %v147
        %v179 = vadd.s32 %v158, %v148
        %v180 = vadd.s32 %v158, %v149
        %v181 = vadd.s32 %v158, %v150
        %v182 = vadd.s32 %v158, %v151
        %s183 = sld [smem:[#allocation2]]
        %s184 = smul.u32 %s183, 1640531527
        %v185 = vstv %s184
        %v186 = vxor.u32 %v159, %v185
        %v187 = vxor.u32 %v160, %v185
        %v188 = vxor.u32 %v161, %v185
        %v189 = vxor.u32 %v162, %v185
        %v190 = vxor.u32 %v163, %v185
        %v191 = vxor.u32 %v164, %v185
        %v192 = vxor.u32 %v165, %v185
        %v193 = vxor.u32 %v166, %v185
        %v194 = vxor.u32 %v167, %v185
        %v195 = vxor.u32 %v168, %v185
        %v196 = vxor.u32 %v169, %v185
        %v197 = vxor.u32 %v170, %v185
        %v198 = vxor.u32 %v171, %v185
        %v199 = vxor.u32 %v172, %v185
        %v200 = vxor.u32 %v173, %v185
        %v201 = vxor.u32 %v174, %v185
        %v202 = vxor.u32 %v175, %v185
        %v203 = vxor.u32 %v176, %v185
        %v204 = vxor.u32 %v177, %v185
        %v205 = vxor.u32 %v178, %v185
        %v206 = vxor.u32 %v179, %v185
        %v207 = vxor.u32 %v180, %v185
        %v208 = vxor.u32 %v181, %v185
        %v209 = vxor.u32 %v182, %v185
        %v210 = vshrl.u32 %v186, 16
        %v211 = vshrl.u32 %v187, 16
        %v212 = vshrl.u32 %v188, 16
        %v213 = vshrl.u32 %v189, 16
        %v214 = vshrl.u32 %v190, 16
        %v215 = vshrl.u32 %v191, 16
        %v216 = vshrl.u32 %v192, 16
        %v217 = vshrl.u32 %v193, 16
        %v218 = vshrl.u32 %v194, 16
        %v219 = vshrl.u32 %v195, 16
        %v220 = vshrl.u32 %v196, 16
        %v221 = vshrl.u32 %v197, 16
        %v222 = vshrl.u32 %v198, 16
        %v223 = vshrl.u32 %v199, 16
        %v224 = vshrl.u32 %v200, 16
        %v225 = vshrl.u32 %v201, 16
        %v226 = vshrl.u32 %v202, 16
        %v227 = vshrl.u32 %v203, 16
        %v228 = vshrl.u32 %v204, 16
        %v229 = vshrl.u32 %v205, 16
        %v230 = vshrl.u32 %v206, 16
        %v231 = vshrl.u32 %v207, 16
        %v232 = vshrl.u32 %v208, 16
        %v233 = vshrl.u32 %v209, 16
        %v234 = vxor.u32 %v186, %v210
        %v235 = vxor.u32 %v187, %v211
        %v236 = vxor.u32 %v188, %v212
        %v237 = vxor.u32 %v189, %v213
        %v238 = vxor.u32 %v190, %v214
        %v239 = vxor.u32 %v191, %v215
        %v240 = vxor.u32 %v192, %v216
        %v241 = vxor.u32 %v193, %v217
        %v242 = vxor.u32 %v194, %v218
        %v243 = vxor.u32 %v195, %v219
        %v244 = vxor.u32 %v196, %v220
        %v245 = vxor.u32 %v197, %v221
        %v246 = vxor.u32 %v198, %v222
        %v247 = vxor.u32 %v199, %v223
        %v248 = vxor.u32 %v200, %v224
        %v249 = vxor.u32 %v201, %v225
        %v250 = vxor.u32 %v202, %v226
        %v251 = vxor.u32 %v203, %v227
        %v252 = vxor.u32 %v204, %v228
        %v253 = vxor.u32 %v205, %v229
        %v254 = vxor.u32 %v206, %v230
        %v255 = vxor.u32 %v207, %v231
        %v256 = vxor.u32 %v208, %v232
        %v257 = vxor.u32 %v209, %v233
        %v258 = vmul.u32 %v234, 569420461
        %v259 = vmul.u32 %v235, 569420461
        %v260 = vmul.u32 %v236, 569420461
        %v261 = vmul.u32 %v237, 569420461
        %v262 = vmul.u32 %v238, 569420461
        %v263 = vmul.u32 %v239, 569420461
        %v264 = vmul.u32 %v240, 569420461
        %v265 = vmul.u32 %v241, 569420461
        %v266 = vmul.u32 %v242, 569420461
        %v267 = vmul.u32 %v243, 569420461
        %v268 = vmul.u32 %v244, 569420461
        %v269 = vmul.u32 %v245, 569420461
        %v270 = vmul.u32 %v246, 569420461
        %v271 = vmul.u32 %v247, 569420461
        %v272 = vmul.u32 %v248, 569420461
        %v273 = vmul.u32 %v249, 569420461
        %v274 = vmul.u32 %v250, 569420461
        %v275 = vmul.u32 %v251, 569420461
        %v276 = vmul.u32 %v252, 569420461
        %v277 = vmul.u32 %v253, 569420461
        %v278 = vmul.u32 %v254, 569420461
        %v279 = vmul.u32 %v255, 569420461
        %v280 = vmul.u32 %v256, 569420461
        %v281 = vmul.u32 %v257, 569420461
        %v282 = vshrl.u32 %v258, 15
        %v283 = vshrl.u32 %v259, 15
        %v284 = vshrl.u32 %v260, 15
        %v285 = vshrl.u32 %v261, 15
        %v286 = vshrl.u32 %v262, 15
        %v287 = vshrl.u32 %v263, 15
        %v288 = vshrl.u32 %v264, 15
        %v289 = vshrl.u32 %v265, 15
        %v290 = vshrl.u32 %v266, 15
        %v291 = vshrl.u32 %v267, 15
        %v292 = vshrl.u32 %v268, 15
        %v293 = vshrl.u32 %v269, 15
        %v294 = vshrl.u32 %v270, 15
        %v295 = vshrl.u32 %v271, 15
        %v296 = vshrl.u32 %v272, 15
        %v297 = vshrl.u32 %v273, 15
        %v298 = vshrl.u32 %v274, 15
        %v299 = vshrl.u32 %v275, 15
        %v300 = vshrl.u32 %v276, 15
        %v301 = vshrl.u32 %v277, 15
        %v302 = vshrl.u32 %v278, 15
        %v303 = vshrl.u32 %v279, 15
        %v304 = vshrl.u32 %v280, 15
        %v305 = vshrl.u32 %v281, 15
        %v306 = vxor.u32 %v258, %v282
        %v307 = vxor.u32 %v259, %v283
        %v308 = vxor.u32 %v260, %v284
        %v309 = vxor.u32 %v261, %v285
        %v310 = vxor.u32 %v262, %v286
        %v311 = vxor.u32 %v263, %v287
        %v312 = vxor.u32 %v264, %v288
        %v313 = vxor.u32 %v265, %v289
        %v314 = vxor.u32 %v266, %v290
        %v315 = vxor.u32 %v267, %v291
        %v316 = vxor.u32 %v268, %v292
        %v317 = vxor.u32 %v269, %v293
        %v318 = vxor.u32 %v270, %v294
        %v319 = vxor.u32 %v271, %v295
        %v320 = vxor.u32 %v272, %v296
        %v321 = vxor.u32 %v273, %v297
        %v322 = vxor.u32 %v274, %v298
        %v323 = vxor.u32 %v275, %v299
        %v324 = vxor.u32 %v276, %v300
        %v325 = vxor.u32 %v277, %v301
        %v326 = vxor.u32 %v278, %v302
        %v327 = vxor.u32 %v279, %v303
        %v328 = vxor.u32 %v280, %v304
        %v329 = vxor.u32 %v281, %v305
        %v330 = vmul.u32 %v306, 1935289751
        %v331 = vmul.u32 %v307, 1935289751
        %v332 = vmul.u32 %v308, 1935289751
        %v333 = vmul.u32 %v309, 1935289751
        %v334 = vmul.u32 %v310, 1935289751
        %v335 = vmul.u32 %v311, 1935289751
        %v336 = vmul.u32 %v312, 1935289751
        %v337 = vmul.u32 %v313, 1935289751
        %v338 = vmul.u32 %v314, 1935289751
        %v339 = vmul.u32 %v315, 1935289751
        %v340 = vmul.u32 %v316, 1935289751
        %v341 = vmul.u32 %v317, 1935289751
        %v342 = vmul.u32 %v318, 1935289751
        %v343 = vmul.u32 %v319, 1935289751
        %v344 = vmul.u32 %v320, 1935289751
        %v345 = vmul.u32 %v321, 1935289751
        %v346 = vmul.u32 %v322, 1935289751
        %v347 = vmul.u32 %v323, 1935289751
        %v348 = vmul.u32 %v324, 1935289751
        %v349 = vmul.u32 %v325, 1935289751
        %v350 = vmul.u32 %v326, 1935289751
        %v351 = vmul.u32 %v327, 1935289751
        %v352 = vmul.u32 %v328, 1935289751
        %v353 = vmul.u32 %v329, 1935289751
        %v354 = vshrl.u32 %v330, 15
        %v355 = vshrl.u32 %v331, 15
        %v356 = vshrl.u32 %v332, 15
        %v357 = vshrl.u32 %v333, 15
        %v358 = vshrl.u32 %v334, 15
        %v359 = vshrl.u32 %v335, 15
        %v360 = vshrl.u32 %v336, 15
        %v361 = vshrl.u32 %v337, 15
        %v362 = vshrl.u32 %v338, 15
        %v363 = vshrl.u32 %v339, 15
        %v364 = vshrl.u32 %v340, 15
        %v365 = vshrl.u32 %v341, 15
        %v366 = vshrl.u32 %v342, 15
        %v367 = vshrl.u32 %v343, 15
        %v368 = vshrl.u32 %v344, 15
        %v369 = vshrl.u32 %v345, 15
        %v370 = vshrl.u32 %v346, 15
        %v371 = vshrl.u32 %v347, 15
        %v372 = vshrl.u32 %v348, 15
        %v373 = vshrl.u32 %v349, 15
        %v374 = vshrl.u32 %v350, 15
        %v375 = vshrl.u32 %v351, 15
        %v376 = vshrl.u32 %v352, 15
        %v377 = vshrl.u32 %v353, 15
        %v378 = vxor.u32 %v330, %v354
        %v379 = vxor.u32 %v331, %v355
        %v380 = vxor.u32 %v332, %v356
        %v381 = vxor.u32 %v333, %v357
        %v382 = vxor.u32 %v334, %v358
        %v383 = vxor.u32 %v335, %v359
        %v384 = vxor.u32 %v336, %v360
        %v385 = vxor.u32 %v337, %v361
        %v386 = vxor.u32 %v338, %v362
        %v387 = vxor.u32 %v339, %v363
        %v388 = vxor.u32 %v340, %v364
        %v389 = vxor.u32 %v341, %v365
        %v390 = vxor.u32 %v342, %v366
        %v391 = vxor.u32 %v343, %v367
        %v392 = vxor.u32 %v344, %v368
        %v393 = vxor.u32 %v345, %v369
        %v394 = vxor.u32 %v346, %v370
        %v395 = vxor.u32 %v347, %v371
        %v396 = vxor.u32 %v348, %v372
        %v397 = vxor.u32 %v349, %v373
        %v398 = vxor.u32 %v350, %v374
        %v399 = vxor.u32 %v351, %v375
        %v400 = vxor.u32 %v352, %v376
        %v401 = vxor.u32 %v353, %v377
        %v402 = vshrl.u32 %v378, 8
        %v403 = vshrl.u32 %v379, 8
        %v404 = vshrl.u32 %v380, 8
        %v405 = vshrl.u32 %v381, 8
        %v406 = vshrl.u32 %v382, 8
        %v407 = vshrl.u32 %v383, 8
        %v408 = vshrl.u32 %v384, 8
        %v409 = vshrl.u32 %v385, 8
        %v410 = vshrl.u32 %v386, 8
        %v411 = vshrl.u32 %v387, 8
        %v412 = vshrl.u32 %v388, 8
        %v413 = vshrl.u32 %v389, 8
        %v414 = vshrl.u32 %v390, 8
        %v415 = vshrl.u32 %v391, 8
        %v416 = vshrl.u32 %v392, 8
        %v417 = vshrl.u32 %v393, 8
        %v418 = vshrl.u32 %v394, 8
        %v419 = vshrl.u32 %v395, 8
        %v420 = vshrl.u32 %v396, 8
        %v421 = vshrl.u32 %v397, 8
        %v422 = vshrl.u32 %v398, 8
        %v423 = vshrl.u32 %v399, 8
        %v424 = vshrl.u32 %v400, 8
        %v425 = vshrl.u32 %v401, 8
        %v426 = vcvt.s32.f32 %v402
        %v427 = vcvt.s32.f32 %v403
        %v428 = vcvt.s32.f32 %v404
        %v429 = vcvt.s32.f32 %v405
        %v430 = vcvt.s32.f32 %v406
        %v431 = vcvt.s32.f32 %v407
        %v432 = vcvt.s32.f32 %v408
        %v433 = vcvt.s32.f32 %v409
        %v434 = vcvt.s32.f32 %v410
        %v435 = vcvt.s32.f32 %v411
        %v436 = vcvt.s32.f32 %v412
        %v437 = vcvt.s32.f32 %v413
        %v438 = vcvt.s32.f32 %v414
        %v439 = vcvt.s32.f32 %v415
        %v440 = vcvt.s32.f32 %v416
        %v441 = vcvt.s32.f32 %v417
        %v442 = vcvt.s32.f32 %v418
        %v443 = vcvt.s32.f32 %v419
        %v444 = vcvt.s32.f32 %v420
        %v445 = vcvt.s32.f32 %v421
        %v446 = vcvt.s32.f32 %v422
        %v447 = vcvt.s32.f32 %v423
        %v448 = vcvt.s32.f32 %v424
        %v449 = vcvt.s32.f32 %v425
        %s450 = sld [smem:[#allocation3 + %s18]]
        %s451 = smul.f32 %s450, 1.1920929e-07
        %v452 = vstv %s451
        %v453 = vmul.f32 %v426, %v452
        %v454 = vmul.f32 %v427, %v452
        %v455 = vmul.f32 %v428, %v452
        %v456 = vmul.f32 %v429, %v452
        %v457 = vmul.f32 %v430, %v452
        %v458 = vmul.f32 %v431, %v452
        %v459 = vmul.f32 %v432, %v452
        %v460 = vmul.f32 %v433, %v452
        %v461 = vmul.f32 %v434, %v452
        %v462 = vmul.f32 %v435, %v452
        %v463 = vmul.f32 %v436, %v452
        %v464 = vmul.f32 %v437, %v452
        %v465 = vmul.f32 %v438, %v452
        %v466 = vmul.f32 %v439, %v452
        %v467 = vmul.f32 %v440, %v452
        %v468 = vmul.f32 %v441, %v452
        %v469 = vmul.f32 %v442, %v452
        %v470 = vmul.f32 %v443, %v452
        %v471 = vmul.f32 %v444, %v452
        %v472 = vmul.f32 %v445, %v452
        %v473 = vmul.f32 %v446, %v452
        %v474 = vmul.f32 %v447, %v452
        %v475 = vmul.f32 %v448, %v452
        %v476 = vmul.f32 %v449, %v452
        %v477 = vstv %s450
        %v478 = vsub.f32 %v453, %v477
        %v479 = vsub.f32 %v454, %v477
        %v480 = vsub.f32 %v455, %v477
        %v481 = vsub.f32 %v456, %v477
        %v482 = vsub.f32 %v457, %v477
        %v483 = vsub.f32 %v458, %v477
        %v484 = vsub.f32 %v459, %v477
        %v485 = vsub.f32 %v460, %v477
        %v486 = vsub.f32 %v461, %v477
        %v487 = vsub.f32 %v462, %v477
        %v488 = vsub.f32 %v463, %v477
        %v489 = vsub.f32 %v464, %v477
        %v490 = vsub.f32 %v465, %v477
        %v491 = vsub.f32 %v466, %v477
        %v492 = vsub.f32 %v467, %v477
        %v493 = vsub.f32 %v468, %v477
        %v494 = vsub.f32 %v469, %v477
        %v495 = vsub.f32 %v470, %v477
        %v496 = vsub.f32 %v471, %v477
        %v497 = vsub.f32 %v472, %v477
        %v498 = vsub.f32 %v473, %v477
        %v499 = vsub.f32 %v474, %v477
        %v500 = vsub.f32 %v475, %v477
        %v501 = vsub.f32 %v476, %v477
        %502 = vst [vmem:[%s136] sm:$0xff] %v478
        %503 = vst [vmem:[%s136 + $0x8] sm:$0xff] %v479
        %504 = vst [vmem:[%s136 + $0x10] sm:$0xff] %v480
        %505 = vst [vmem:[%s136 + $0x18] sm:$0xff] %v481
        %506 = vst [vmem:[%s136 + $0x20] sm:$0xff] %v482
        %507 = vst [vmem:[%s136 + $0x28] sm:$0xff] %v483
        %508 = vst [vmem:[%s136 + $0x30] sm:$0xff] %v484
        %509 = vst [vmem:[%s136 + $0x38] sm:$0xff] %v485
        %510 = vst [vmem:[%s136 + $0x40] sm:$0xff] %v486
        %511 = vst [vmem:[%s136 + $0x48] sm:$0xff] %v487
        %512 = vst [vmem:[%s136 + $0x50] sm:$0xff] %v488
        %513 = vst [vmem:[%s136 + $0x58] sm:$0xff] %v489
        %514 = vst [vmem:[%s136 + $0x60] sm:$0xff] %v490
        %515 = vst [vmem:[%s136 + $0x68] sm:$0xff] %v491
        %516 = vst [vmem:[%s136 + $0x70] sm:$0xff] %v492
        %517 = vst [vmem:[%s136 + $0x78] sm:$0xff] %v493
        %518 = vst [vmem:[%s136 + $0x80] sm:$0xff] %v494
        %519 = vst [vmem:[%s136 + $0x88] sm:$0xff] %v495
        %520 = vst [vmem:[%s136 + $0x90] sm:$0xff] %v496
        %521 = vst [vmem:[%s136 + $0x98] sm:$0xff] %v497
        %522 = vst [vmem:[%s136 + $0xa0] sm:$0xff] %v498
        %523 = vst [vmem:[%s136 + $0xa8] sm:$0xff] %v499
        %524 = vst [vmem:[%s136 + $0xb0] sm:$0xff] %v500
        %525 = vst [vmem:[%s136 + $0xb8] sm:$0xff] %v501
        %s526 = sand.u32 %s68, 1
        %s527 = scalar_lea.sflag [#allocation4], %s526
        %s528 = sand.u32 %s68, 1
        %s529 = smul.addr %s528, 192
        %s530 = scalar_lea.vmem [#allocation6], %s529
        // Predicated region
        $region33: #{tpu_custom_call.1} parent=27 // pred_check
          %p531 = pneg %p78
        $region34: #{tpu_custom_call.1} parent=27 // pred_check_branch
          %533 = sbr.rel (%p531) target = $region36
        $region35: #{tpu_custom_call.1} parent=27 // pred_region
          %s534 = smul.u32 3, %s18
          %s536 = ssub.s32 3072, 3072
          %537 = vsyncadd %s527, %s536
          %s538 = smul.addr %s534, 8
          %s539 = smul.addr %s538, 128
          %s540 = scalar_lea.hbm %s2, %s539
          %s541 = sshll.u32 %s530, 4
          %s542 = int_to_ptr.vmem [resolvable:$true] %s541
          %547 = dma.vmem_to_hbm [thread:$0]  %s542, 3072, %s540, %s527, 1024, 1024, 64
        $region36: #{tpu_custom_call.1} parent=27 // pred_fallthru
          _
      $region28: #{tpu_custom_call.1} parent=5 // pred_fallthru
        _
      %p548 = scmp.le.s32.totalorder 2, %s13
      // Predicated region
      $region37: #{tpu_custom_call.1} parent=5 // pred_check
        %p549 = pneg %p548
      $region38: #{tpu_custom_call.1} parent=5 // pred_check_branch
        %551 = sbr.rel (%p549) target = $region40
      $region39: #{tpu_custom_call.1} parent=5 // pred_region
        %s552 = ssub.s32 %s13, 2
        // Predicated region
        $region41: #{tpu_custom_call.1} parent=39 // pred_check
          %p553 = pneg %p84
        $region42: #{tpu_custom_call.1} parent=39 // pred_check_branch
          %555 = sbr.rel (%p553) target = $region44
        $region43: #{tpu_custom_call.1} parent=39 // pred_region
          %s556 = sand.u32 %s69, 1
          %s557 = scalar_lea.sflag [#allocation4], %s556
          %s558 = sand.u32 %s69, 1
          %s559 = smul.addr %s558, 192
          %s560 = scalar_lea.vmem [#allocation6], %s559
          %561 = dma.done %s557, 3072
        $region44: #{tpu_custom_call.1} parent=39 // pred_fallthru
          _
      $region40: #{tpu_custom_call.1} parent=5 // pred_fallthru
        _
    $region6: #{tpu_custom_call.1} parent=1 // loop_footer
      %s17 = sadd.s32 1, %s13
    $region7: #{tpu_custom_call.1} parent=1 // loop_footer_branch
      %12 = sbr.rel target = $region3
    $region8: #{tpu_custom_call.1} parent=1 // loop_exit
      _
    %562 = vsyncpa [#allocation4], 1
    %s563 = scalar_lea.sflag [#allocation4], 1
    %564 = vsyncpa %s563, 1
    %565 = vsyncpa [#allocation5], 1
    %s566 = scalar_lea.sflag [#allocation5], 1
    %567 = vsyncpa %s566, 1

</llo_original>
